<compile_context>
chip_gen: v7x
topology: tpu7x:2x2x1
jax: 0.10.0
libtpu: 0.0.40
codegen_flags: <defaults>
</compile_context>

<pallas_src>
import jax
import jax.numpy as jnp
from jax import lax
from jax.experimental import pallas as pl
from jax.experimental.pallas import tpu as pltpu


def _round_up(x: int, m: int) -> int:
    return ((x + m - 1) // m) * m


def edema_head_kernel(cls_ref, w_ref, b_ref, o_ref):
    # cls_ref: (TB, E)   CLS tokens (only this window was DMA'd from HBM)
    # w_ref:   (Cp, E)   linear weight, torch (C, E) layout, class-padded
    # b_ref:   (1, Cp)   linear bias, class-padded, f32
    # o_ref:   (TB, Cp)  f32 logits
    logits = lax.dot_general(
        cls_ref[...], w_ref[...],
        dimension_numbers=(((1,), (1,)), ((), ())),   # contract E with E, no .T
        preferred_element_type=jnp.float32,
    )                                                  # MXU, f32 accumulate
    o_ref[...] = (logits + b_ref[...]).astype(o_ref.dtype)


def prepare_edema_head_params(weight, bias, param_dtype=None):
    """Init-time (called once) padding / casting of the classifier params.

    weight: (C, E) torch-layout linear weight
    bias:   (C,)
    param_dtype: optional compute dtype for the weight (e.g. jnp.bfloat16 when
                 the encoder emits bf16).  Bias stays f32 (f32 epilogue).
    """
    C, E = weight.shape
    Cp = _round_up(max(C, 128), 128)                     # lane-dense classes
    if param_dtype is not None:
        weight = weight.astype(param_dtype)
    w_p = jnp.pad(weight, ((0, Cp - C), (0, 0)))          # (Cp, E)
    b_p = jnp.pad(bias.astype(jnp.float32), (0, Cp - C)).reshape(1, Cp)
    return w_p, b_p


def m3t_edema_head(x_tokens, w_p, b_p, num_classes):
    """EdemaHead forward: nn.Linear(E, C)(x_tokens[:, 0]).

    x_tokens: (B, S, E) encoder token output (CLS at token index 0)
    w_p:      (Cp, E)   pre-padded weight (prepare_edema_head_params)
    b_p:      (1, Cp)   pre-padded f32 bias
    returns:  (B, num_classes) f32 logits
    """
    B, S, E = x_tokens.shape
    Cp, Ew = w_p.shape
    assert Ew == E
    assert E % 128 == 0, "emb_size must be a multiple of 128 (lane width)"

    # Free dim-merge reshape (bitcast, no copy): the CLS token of batch row b
    # is columns [0, E) of row b.  The BlockSpec below DMAs exactly that
    # window, so the full (B, S, E) tensor never reaches VMEM.
    x2d = x_tokens.reshape(B, S * E)

    # Whole batch in one grid step (each step ~0.35us pipeline overhead);
    # split across two "parallel" steps only when there is enough work for
    # both v7x TensorCores.  On v5e/v6e (single TC) one step is always best.
    if B >= 512 and B % 16 == 0:
        num_tiles = 2
    else:
        num_tiles = 1
    TB = B // num_tiles            # TB == B (full dim) or a multiple of 8

    cost = pl.CostEstimate(
        flops=2 * B * Cp * E,
        transcendentals=0,
        bytes_accessed=(x_tokens.dtype.itemsize * B * E      # CLS window only
                        + w_p.dtype.itemsize * Cp * E
                        + 4 * Cp
                        + 4 * B * Cp),
    )

    out_padded = pl.pallas_call(
        edema_head_kernel,
        out_shape=jax.ShapeDtypeStruct((B, Cp), jnp.float32),
        grid_spec=pltpu.PrefetchScalarGridSpec(
            num_scalar_prefetch=0,
            grid=(num_tiles,),
            in_specs=[
                pl.BlockSpec((TB, E), lambda i: (i, 0)),   # CLS window per tile
                pl.BlockSpec((Cp, E), lambda i: (0, 0)),   # weight stays resident
                pl.BlockSpec((1, Cp), lambda i: (0, 0)),   # bias (one vreg row)
            ],
            out_specs=pl.BlockSpec((TB, Cp), lambda i: (i, 0)),
        ),
        compiler_params=pltpu.CompilerParams(
            dimension_semantics=("parallel",),             # megacore when tiled
        ),
        cost_estimate=cost,
    )(x2d, w_p, b_p)

    return out_padded[:, :num_classes]


if __name__ == "__main__":
    # Small, deterministic example shapes consistent with the module.
    B, S, E, C = 2, 8, 256, 2          # batch, tokens (CLS + 7), emb_size, classes

    key = jax.random.PRNGKey(0)
    kx, kw, kb = jax.random.split(key, 3)

    # Encoder output token sequence (stand-in for Encoder(cfg)(x)).
    x_tokens = jax.random.normal(kx, (B, S, E), dtype=jnp.float32)

    # Deterministic nn.Linear-style init: U(-1/sqrt(E), 1/sqrt(E)).
    bound = 1.0 / (E ** 0.5)
    weight = jax.random.uniform(kw, (C, E), minval=-bound, maxval=bound,
                                dtype=jnp.float32)
    bias = jax.random.uniform(kb, (C,), minval=-bound, maxval=bound,
                              dtype=jnp.float32)

    head_fn = jax.jit(m3t_edema_head, static_argnums=(3,))

    # ---- f32 path (params padded once at init, reused every call). ----
    w_p, b_p = prepare_edema_head_params(weight, bias)
    out = jax.block_until_ready(head_fn(x_tokens, w_p, b_p, C))

    ref = x_tokens[:, 0, :] @ weight.T + bias
    assert out.shape == (B, C)
    # TPU MXU default precision decomposes f32 matmuls to bf16 passes;
    # tolerance is set accordingly (the head is a 256-term dot per logit).
    assert jnp.allclose(out, ref, atol=1e-2, rtol=1e-2)

    # ---- bf16 path (as if the encoder emitted bf16): half the DMA traffic,
    # native bf16 MXU, f32 bias epilogue.  No per-call casts in the wrapper.
    w_p16, b_p16 = prepare_edema_head_params(weight, bias,
                                             param_dtype=jnp.bfloat16)
    x_bf16 = x_tokens.astype(jnp.bfloat16)      # stands in for bf16 encoder output
    out16 = jax.block_until_ready(head_fn(x_bf16, w_p16, b_p16, C))
    assert out16.shape == (B, C)
    assert out16.dtype == jnp.float32
    assert jnp.allclose(out16, ref, atol=1e-1, rtol=1e-1)

    print("KERNEL_OK")
</pallas_src>

<mosaic_0001>
module attributes {stable_mosaic.version = 11 : i64} {
  func.func @edema_head_kernel(%arg0: i32, %arg1: memref<2x256xf32, #tpu.memory_space<vmem>>, %arg2: memref<128x256xf32, #tpu.memory_space<vmem>>, %arg3: memref<1x128xf32, #tpu.memory_space<vmem>>, %arg4: memref<2x128xf32, #tpu.memory_space<vmem>>) attributes {dimension_semantics = [#tpu.dimension_semantics<parallel>], iteration_bounds = array<i64: 1>, scalar_prefetch = 0 : i64, scratch_operands = 0 : i64, tpu.core_type = #tpu.core_type<tc>, window_params = [{transform_indices = @transform_0, window_bounds = array<i64: 2, 256>}, {pipeline_mode = #tpu.pipeline_mode<synchronous>, transform_indices = @transform_1, window_bounds = array<i64: 128, 256>}, {pipeline_mode = #tpu.pipeline_mode<synchronous>, transform_indices = @transform_2, window_bounds = array<i64: 1, 128>}, {transform_indices = @transform_3, window_bounds = array<i64: 2, 128>}]} {
    %c0 = arith.constant 0 : index
    %c0_0 = arith.constant 0 : index
    %0 = vector.load %arg1[%c0, %c0_0] : memref<2x256xf32, #tpu.memory_space<vmem>>, vector<2x256xf32>
    %c0_1 = arith.constant 0 : index
    %c0_2 = arith.constant 0 : index
    %1 = vector.load %arg2[%c0_1, %c0_2] : memref<128x256xf32, #tpu.memory_space<vmem>>, vector<128x256xf32>
    %cst = arith.constant dense<0.000000e+00> : vector<2x128xf32>
    %2 = tpu.matmul %0, %1, %cst {dimension_numbers = #tpu.dot_dimension_numbers<[1], [1], [0], [0], [0, 0, 1, 0], [], []>} : vector<2x256xf32>, vector<128x256xf32>, vector<2x128xf32> -> vector<2x128xf32>
    %c0_3 = arith.constant 0 : index
    %c0_4 = arith.constant 0 : index
    %3 = vector.load %arg3[%c0_3, %c0_4] : memref<1x128xf32, #tpu.memory_space<vmem>>, vector<1x128xf32>
    %4 = vector.broadcast %3 : vector<1x128xf32> to vector<2x128xf32>
    %5 = arith.addf %2, %4 : vector<2x128xf32>
    %c0_5 = arith.constant 0 : index
    %c0_6 = arith.constant 0 : index
    %6 = vector.load %arg4[%c0_5, %c0_6] : memref<2x128xf32, #tpu.memory_space<vmem>>, vector<2x128xf32>
    tpu.vector_store %arg4[%c0_5, %c0_6], %5 {strides = array<i32>} : memref<2x128xf32, #tpu.memory_space<vmem>>, vector<2x128xf32>,
    return
  }
  func.func @transform_0(%arg0: i32) -> (i32, i32) {
    %c0_i32 = arith.constant 0 : i32
    %c0_i32_0 = arith.constant 0 : i32
    return %arg0, %c0_i32 : i32, i32
  }
  func.func @transform_1(%arg0: i32) -> (i32, i32) {
    %c0_i32 = arith.constant 0 : i32
    %c0_i32_0 = arith.constant 0 : i32
    %c0_i32_1 = arith.constant 0 : i32
    return %c0_i32, %c0_i32_0 : i32, i32
  }
  func.func @transform_2(%arg0: i32) -> (i32, i32) {
    %c0_i32 = arith.constant 0 : i32
    %c0_i32_0 = arith.constant 0 : i32
    %c0_i32_1 = arith.constant 0 : i32
    return %c0_i32, %c0_i32_0 : i32, i32
  }
  func.func @transform_3(%arg0: i32) -> (i32, i32) {
    %c0_i32 = arith.constant 0 : i32
    %c0_i32_0 = arith.constant 0 : i32
    return %arg0, %c0_i32 : i32, i32
  }
}

</mosaic_0001>

<llo_original>
// kernel: m3t_edema_head.1
$region0: #{m3t_edema_head.1}
  #allocation0 [shape = 'u32[]', space=smem, size = 0x4, offset = 0x4, fixed_abs, tag = 'smem constant byte address 0x4 - core index']
  #allocation1 [shape = 'u32[144,128]{1,0:T(1,128)}', space=vmem, size = 0x12000, scoped, tag = 'internal scratch']
  %s0 = inlined_call_operand.vmem [shape: f32[2,2048], index: 0, kind: input, shape index: {}]
  %s1 = inlined_call_operand.hbm [shape: f32[128,256], index: 1, kind: input, shape index: {}]
  %s2 = inlined_call_operand.vmem [shape: f32[1,128], index: 2, kind: input, shape index: {}]
  %s3 = inlined_call_operand.hbm [shape: f32[2,128], index: 3, kind: output, shape index: {}]
  %s4 = sld [smem:[#allocation0]]
  $region26: #{m3t_edema_head.1} parent=0
    _
  %s6 = ssub.s32 1, %s4
  %s7 = scalar_select 0, %s6, %s4
  $region1: #{m3t_edema_head.1} parent=0
    #allocation2 [shape = 'u8[131072]{0}', space=vmem, size = 0x20000, scoped, tag = 'input window, operand 1, single buffered']
    #allocation3 [shape = 's32[1]{0}', space=sflag, size = 0x4, scoped, tag = 'scoped memory for m3t_edema_head.1']
    #allocation4 [shape = 's32[1]{0}', space=sflag, size = 0x4, scoped, tag = 'scoped memory for m3t_edema_head.1']
    #allocation5 [shape = 'u8[1024]{0}', space=vmem, size = 0x400, scoped, tag = 'output window, operand 0, single buffered']
    %8 = vsyncpa [#allocation3], 0
    %9 = vsyncpa [#allocation4], 0
    // Predicated region
    $region2: #{m3t_edema_head.1} parent=1 // pred_check
      _
    $region3: #{m3t_edema_head.1} parent=1 // pred_check_branch
      %11 = sbr.rel (0) target = $region5
    $region4: #{m3t_edema_head.1} parent=1 // pred_region
      _
    $region5: #{m3t_edema_head.1} parent=1 // pred_fallthru
      _
    // Predicated region
    $region6: #{m3t_edema_head.1} parent=1 // pred_check
      _
    $region7: #{m3t_edema_head.1} parent=1 // pred_check_branch
      %13 = sbr.rel (0) target = $region9
    $region8: #{m3t_edema_head.1} parent=1 // pred_region
      %s15 = ssub.s32 4096, 4096
      %16 = vsyncadd [#allocation3], %s15
      %s17 = sshll.u32 [#allocation2], 4
      %s18 = int_to_ptr.vmem [resolvable:$true] %s17
      %23 = dma.hbm_to_vmem [thread:$0]  %s1, 4096, %s18, [#allocation3], 256, 256, 16
    $region9: #{m3t_edema_head.1} parent=1 // pred_fallthru
      _
    // Predicated region
    $region10: #{m3t_edema_head.1} parent=1 // pred_check
      _
    $region11: #{m3t_edema_head.1} parent=1 // pred_check_branch
      %25 = sbr.rel (0) target = $region13
    $region12: #{m3t_edema_head.1} parent=1 // pred_region
      _
    $region13: #{m3t_edema_head.1} parent=1 // pred_fallthru
      _
    // Predicated region
    $region14: #{m3t_edema_head.1} parent=1 // pred_check
      _
    $region15: #{m3t_edema_head.1} parent=1 // pred_check_branch
      %27 = sbr.rel (0) target = $region17
    $region16: #{m3t_edema_head.1} parent=1 // pred_region
      %28 = dma.done [#allocation3], 4096
    $region17: #{m3t_edema_head.1} parent=1 // pred_fallthru
      _
    %v29 = vld [vmem:[%s0] sm:$0xf]
    %v30 = vld [vmem:[#allocation2] sm:$0xff]
    %v31 = vld [vmem:[#allocation2 + $0x8] sm:$0xff]
    %v32 = vld [vmem:[#allocation2 + $0x10] sm:$0xff]
    %v33 = vld [vmem:[#allocation2 + $0x18] sm:$0xff]
    %v34 = vld [vmem:[#allocation2 + $0x20] sm:$0xff]
    %v35 = vld [vmem:[#allocation2 + $0x28] sm:$0xff]
    %v36 = vld [vmem:[#allocation2 + $0x30] sm:$0xff]
    %v37 = vld [vmem:[#allocation2 + $0x38] sm:$0xff]
    %v38 = vld [vmem:[#allocation2 + $0x40] sm:$0xff]
    %v39 = vld [vmem:[#allocation2 + $0x48] sm:$0xff]
    %v40 = vld [vmem:[#allocation2 + $0x50] sm:$0xff]
    %v41 = vld [vmem:[#allocation2 + $0x58] sm:$0xff]
    %v42 = vld [vmem:[#allocation2 + $0x60] sm:$0xff]
    %v43 = vld [vmem:[#allocation2 + $0x68] sm:$0xff]
    %v44 = vld [vmem:[#allocation2 + $0x70] sm:$0xff]
    %v45 = vld [vmem:[#allocation2 + $0x78] sm:$0xff]
    %v46 = vld [vmem:[#allocation2 + $0x80] sm:$0xff]
    %v47 = vld [vmem:[#allocation2 + $0x88] sm:$0xff]
    %v48 = vld [vmem:[#allocation2 + $0x90] sm:$0xff]
    %v49 = vld [vmem:[#allocation2 + $0x98] sm:$0xff]
    %v50 = vld [vmem:[#allocation2 + $0xa0] sm:$0xff]
    %v51 = vld [vmem:[#allocation2 + $0xa8] sm:$0xff]
    %v52 = vld [vmem:[#allocation2 + $0xb0] sm:$0xff]
    %v53 = vld [vmem:[#allocation2 + $0xb8] sm:$0xff]
    %v54 = vld [vmem:[#allocation2 + $0xc0] sm:$0xff]
    %v55 = vld [vmem:[#allocation2 + $0xc8] sm:$0xff]
    %v56 = vld [vmem:[#allocation2 + $0xd0] sm:$0xff]
    %v57 = vld [vmem:[#allocation2 + $0xd8] sm:$0xff]
    %v58 = vld [vmem:[#allocation2 + $0xe0] sm:$0xff]
    %v59 = vld [vmem:[#allocation2 + $0xe8] sm:$0xff]
    %v60 = vld [vmem:[#allocation2 + $0xf0] sm:$0xff]
    %v61 = vld [vmem:[#allocation2 + $0xf8] sm:$0xff]
    %v62 = vld [vmem:[%s2] sm:$0x1]
    %v64 = vlaneseq
    %v65 = vshrl.u32 %v64, 7
    %v66 = vsub.s32 0, %v65
    %v67 = vrot.slane %v62, %v66
    %v71 = vunpack.c.l.s4 1983009808
    %v72 = vunpack.c.0.s8 %v71
    %v73 = vlaneseq
    %v74 = vshrl.u32 %v73, 7
    %v75 = vsub.s32 %v72, %v74
    %v76 = vrot.slane %v29, %v75
    %v77 = vcombine.high %v76, %v76
    %80 = vmatprep.subr.mxu0 %v31
    %81 = vmatpush1.xpose.msra.mxu0 %v30
    %82 = vmatprep.subr.mxu0 %v33
    %83 = vmatpush1.xpose.msra.mxu0 %v32
    %84 = vmatprep.subr.mxu0 %v35
    %85 = vmatpush1.xpose.msra.mxu0 %v34
    %86 = vmatprep.subr.mxu0 %v37
    %87 = vmatpush1.xpose.msra.mxu0 %v36
    %88 = vmatprep.subr.mxu0 %v39
    %89 = vmatpush1.xpose.msra.mxu0 %v38
    %90 = vmatprep.subr.mxu0 %v41
    %91 = vmatpush1.xpose.msra.mxu0 %v40
    %92 = vmatprep.subr.mxu0 %v43
    %93 = vmatpush1.xpose.msra.mxu0 %v42
    %94 = vmatprep.subr.mxu0 %v45
    %95 = vmatpush1.xpose.msra.mxu0 %v44
    %96 = vmatprep.subr.mxu0 %v47
    %97 = vmatpush1.xpose.msra.mxu0 %v46
    %98 = vmatprep.subr.mxu0 %v49
    %99 = vmatpush1.xpose.msra.mxu0 %v48
    %100 = vmatprep.subr.mxu0 %v51
    %101 = vmatpush1.xpose.msra.mxu0 %v50
    %102 = vmatprep.subr.mxu0 %v53
    %103 = vmatpush1.xpose.msra.mxu0 %v52
    %104 = vmatprep.subr.mxu0 %v55
    %105 = vmatpush1.xpose.msra.mxu0 %v54
    %106 = vmatprep.subr.mxu0 %v57
    %107 = vmatpush1.xpose.msra.mxu0 %v56
    %108 = vmatprep.subr.mxu0 %v59
    %109 = vmatpush1.xpose.msra.mxu0 %v58
    %110 = vmatprep.subr.mxu0 %v61
    %111 = vmatpush1.xpose.msra.mxu0 %v60
    %112 = vmatprep.subr.mxu0 0.0
    %113 = vmatpush1.xpose.msra.mxu0 0.0
    %114 = vmatprep.subr.mxu0 0.0
    %115 = vmatpush1.xpose.msra.mxu0 0.0
    %116 = vmatprep.subr.mxu0 0.0
    %117 = vmatpush1.xpose.msra.mxu0 0.0
    %118 = vmatprep.subr.mxu0 0.0
    %119 = vmatpush1.xpose.msra.mxu0 0.0
    %120 = vmatprep.subr.mxu0 0.0
    %121 = vmatpush1.xpose.msra.mxu0 0.0
    %122 = vmatprep.subr.mxu0 0.0
    %123 = vmatpush1.xpose.msra.mxu0 0.0
    %124 = vmatprep.subr.mxu0 0.0
    %125 = vmatpush1.xpose.msra.mxu0 0.0
    %126 = vmatprep.subr.mxu0 0.0
    %127 = vmatpush1.xpose.msra.mxu0 0.0
    %128 = vmatprep.subr.mxu0 0.0
    %129 = vmatpush1.xpose.msra.mxu0 0.0
    %130 = vmatprep.subr.mxu0 0.0
    %131 = vmatpush1.xpose.msra.mxu0 0.0
    %132 = vmatprep.subr.mxu0 0.0
    %133 = vmatpush1.xpose.msra.mxu0 0.0
    %134 = vmatprep.subr.mxu0 0.0
    %135 = vmatpush1.xpose.msra.mxu0 0.0
    %136 = vmatprep.subr.mxu0 0.0
    %137 = vmatpush1.xpose.msra.mxu0 0.0
    %138 = vmatprep.subr.mxu0 0.0
    %139 = vmatpush1.xpose.msra.mxu0 0.0
    %140 = vmatprep.subr.mxu0 0.0
    %141 = vmatpush1.xpose.msra.mxu0 0.0
    %142 = vmatprep.subr.mxu0 0.0
    %143 = vmatpush1.xpose.msra.mxu0 0.0
    %144 = vmatprep.mubr.f32.mxu0 %v77
    %145 = vmatmul.mubr.f32.gmra.mrb[0].mxu0 %v76
    %v146 = vpop.f32.mrb[0].mxu0
    %v147 = vadd.f32 %v67, %v146
    %v148 = vpop.f32.mrb[0].mxu0
    %149 = vdwg.mxu0
    %150 = vst [vmem:[#allocation5] sm:$0x3] %v147
    // Predicated region
    $region18: #{m3t_edema_head.1} parent=1 // pred_check
      _
    $region19: #{m3t_edema_head.1} parent=1 // pred_check_branch
      %152 = sbr.rel (0) target = $region21
    $region20: #{m3t_edema_head.1} parent=1 // pred_region
      %s154 = ssub.s32 32, 32
      %155 = vsyncadd [#allocation4], %s154
      %s157 = sshll.u32 [#allocation5], 4
      %s158 = int_to_ptr.vmem [resolvable:$true] %s157
      %160 = dma.vmem_to_hbm [thread:$0]  %s158, 32, %s3, [#allocation4]
    $region21: #{m3t_edema_head.1} parent=1 // pred_fallthru
      _
    // Predicated region
    $region22: #{m3t_edema_head.1} parent=1 // pred_check
      _
    $region23: #{m3t_edema_head.1} parent=1 // pred_check_branch
      %162 = sbr.rel (0) target = $region25
    $region24: #{m3t_edema_head.1} parent=1 // pred_region
      %163 = dma.done [#allocation4], 32
    $region25: #{m3t_edema_head.1} parent=1 // pred_fallthru
      _
    %164 = vsyncpa [#allocation3], 1
    %165 = vsyncpa [#allocation4], 1

</llo_original>
